<compile_context>
chip_gen: v7x
topology: tpu7x:2x2x1
jax: 0.10.0
libtpu: 0.0.40
codegen_flags: <defaults>
</compile_context>

<pallas_src>
import functools

import jax
import jax.numpy as jnp
from jax import lax
from jax.experimental import pallas as pl
from jax.experimental.pallas import tpu as pltpu


def _round_up(x, m):
    return ((x + m - 1) // m) * m


def _physical_vmem_bytes():
    """Per-core physical VMEM; conservative 64 MiB (v7x) if the query fails."""
    try:
        info = pltpu.get_tpu_info()
        for attr in ("vmem_capacity_bytes", "vmem_size_bytes", "vmem_bytes"):
            v = getattr(info, attr, None)
            if v:
                return int(v)
    except Exception:
        pass
    return 64 * 1024 * 1024


def _largest_aligned_divisor(dim, cap, align=8):
    """Largest t <= cap with dim % t == 0 and (t % align == 0 or t == dim).
    Returns None if no such tile exists (caller falls back to padding)."""
    if dim <= cap:
        return dim
    t = (cap // align) * align
    while t >= align:
        if dim % t == 0:
            return t
        t -= align
    return None


def _best_padding_tile(dim, cap, align=8):
    """align-multiple tile <= cap minimizing round_up(dim, tile); ties -> larger."""
    best_t, best_pad = align, _round_up(dim, align)
    t = max(align, (cap // align) * align)
    while t >= align:
        p = _round_up(dim, t)
        if p < best_pad or (p == best_pad and t > best_t):
            best_t, best_pad = t, p
        t -= align
    return best_t


def _plan_tiles(B, S, E, x_itemsize, out_itemsize, C_pad, resident_bytes,
                vmem_budget):
    """Pick (TB, TS) so 2*TB*TS*E*itemsize (x window) + resident weight/bias +
    f32 acc + output block fits the VMEM byte budget.  TB shrinks before TS."""
    # --- batch tile ------------------------------------------------------
    tb_cap = min(256, _round_up(B, 8))
    if B > 8:
        # Keep grid[0] >= 2 so the "parallel" batch axis can shard across the
        # two TensorCores of a v7x chip (harmless on single-TC parts).
        tb_cap = min(tb_cap, _round_up(pl.cdiv(B, 2), 8))
    tb = _largest_aligned_divisor(B, tb_cap)
    if tb is None:
        tb = _best_padding_tile(B, tb_cap)

    def max_ts(tb_):
        fixed = (resident_bytes                      # weight + bias (resident)
                 + tb_ * E * 4                       # f32 accumulator scratch
                 + 2 * tb_ * C_pad * out_itemsize)   # output block (2 bufs)
        avail = vmem_budget - fixed
        if avail <= 0:
            return 0
        return avail // (2 * tb_ * E * x_itemsize)   # x window double-buffered

    # Shrink TB (before TS) until at least a modest sequence chunk fits.
    ts_floor = min(S, 64)
    while tb > 8 and max_ts(tb) < ts_floor:
        new_cap = max(8, ((tb // 2) // 8) * 8)
        tb = (_largest_aligned_divisor(B, new_cap)
              or _best_padding_tile(B, new_cap))

    # --- sequence tile ---------------------------------------------------
    cap = max(8, max_ts(tb))
    if S <= cap:
        ts = S
    else:
        ts = _largest_aligned_divisor(S, cap)
        if ts is None:
            ts = _best_padding_tile(S, cap)
    return tb, ts


def _vmem_limit_bytes(tb, ts, E, C_pad, x_itemsize, out_itemsize,
                      resident_bytes, phys_vmem):
    needed = (2 * tb * ts * E * x_itemsize        # double-buffered x window
              + 2 * resident_bytes                # weight + bias (worst case)
              + tb * E * 4                        # f32 accumulator scratch
              + 2 * tb * C_pad * out_itemsize)    # output block
    limit = int(needed * 1.25) + (2 << 20)        # headroom + internal scratch
    limit = max(limit, 16 << 20)
    return min(limit, phys_vmem)


def classifier_kernel(x_ref, w_ref, b_ref, o_ref, acc_ref, *, inv_seq_len):
    # x_ref: (TB, TS, E)   w_ref: (C_pad, E)   b_ref: (1, C_pad)
    # o_ref: (TB, C_pad)   acc_ref: (TB, E) f32 scratch (running pooled sum)
    s = pl.program_id(1)

    @pl.when(s == 0)
    def _():
        acc_ref[...] = jnp.zeros_like(acc_ref)

    # Sum (not mean) this sequence chunk; accumulate in f32 regardless of
    # input dtype (bf16 inputs are upcast per-chunk, never materialized whole).
    acc_ref[...] += jnp.sum(x_ref[...], axis=1, dtype=jnp.float32)

    @pl.when(s == pl.num_programs(1) - 1)
    def _():
        pooled = acc_ref[...]                                    # (TB, E) f32
        # Keep the weight in its native dtype (bf16 MXU fast path when bf16);
        # cast only the small pooled operand, accumulate in f32 on the MXU.
        y = lax.dot_general(pooled.astype(w_ref.dtype), w_ref[...],
                            dimension_numbers=(((1,), (1,)), ((), ())),
                            preferred_element_type=jnp.float32)  # (TB, C_pad)
        # Fold the mean's 1/S (original S) into the small post-matmul result.
        y = y * inv_seq_len + b_ref[...].astype(jnp.float32)
        o_ref[...] = y.astype(o_ref.dtype)


def classifier_forward(x, weight, bias):
    """x: (B, S, E); weight: (C, E) (PyTorch nn.Linear layout); bias: (C,)."""
    B, S, E = x.shape
    C = weight.shape[0]

    x_itemsize = jnp.dtype(x.dtype).itemsize
    w_itemsize = jnp.dtype(weight.dtype).itemsize
    b_itemsize = jnp.dtype(bias.dtype).itemsize
    out_dtype = x.dtype
    out_itemsize = jnp.dtype(out_dtype).itemsize

    # Lane-dense output: pad class dim up to a multiple of 128.
    C_pad = _round_up(C, 128)
    w_pad = jnp.pad(weight, ((0, C_pad - C), (0, 0)))        # (C_pad, E)
    b_pad = jnp.pad(bias, (0, C_pad - C)).reshape(1, C_pad)  # (1, C_pad)
    resident_bytes = C_pad * E * w_itemsize + C_pad * b_itemsize

    # Per-generation VMEM byte budget: ~48 MiB on v7x, ~96 MiB on v5e/v6e.
    phys_vmem = _physical_vmem_bytes()
    budget = min((phys_vmem * 3) // 4, 100 << 20)

    TB, TS = _plan_tiles(B, S, E, x_itemsize, out_itemsize, C_pad,
                         resident_bytes, budget)

    # Pad batch/sequence so the tiles divide exactly.  Zero-padding the
    # sequence is exact for a sum (the mean divides by the original S);
    # padded batch rows are sliced off below.
    B_pad = _round_up(B, TB)
    S_pad = _round_up(S, TS)
    if B_pad != B or S_pad != S:
        x = jnp.pad(x, ((0, B_pad - B), (0, S_pad - S), (0, 0)))

    grid = (B_pad // TB, S_pad // TS)
    kernel = functools.partial(classifier_kernel, inv_seq_len=1.0 / S)

    vmem_limit = _vmem_limit_bytes(TB, TS, E, C_pad, x_itemsize, out_itemsize,
                                   resident_bytes, phys_vmem)

    cost = pl.CostEstimate(
        flops=B_pad * S_pad * E            # pooling: adds only
              + 2 * B_pad * E * C_pad      # epilogue matmul
              + 2 * B_pad * C_pad,         # scale + bias
        transcendentals=0,
        bytes_accessed=(B_pad * S_pad * E * x_itemsize
                        + resident_bytes
                        + B_pad * C_pad * out_itemsize),
    )

    def _call(single_buffer_resident):
        # Resident operands (same block every step) don't need a 2nd pipeline
        # buffer; this matters when C_pad*E is large (vocab-sized heads).
        resident_kw = ({"pipeline_mode": pl.Buffered(1)}
                       if single_buffer_resident else {})
        return pl.pallas_call(
            kernel,
            out_shape=jax.ShapeDtypeStruct((B_pad, C_pad), out_dtype),
            grid_spec=pltpu.PrefetchScalarGridSpec(
                num_scalar_prefetch=0,
                grid=grid,
                in_specs=[
                    # x: stream (TB, TS, E) chunks; double-buffered by Pallas.
                    pl.BlockSpec((TB, TS, E), lambda b, s: (b, s, 0)),
                    # weight/bias: same block every step -> VMEM-resident.
                    pl.BlockSpec((C_pad, E), lambda b, s: (0, 0), **resident_kw),
                    pl.BlockSpec((1, C_pad), lambda b, s: (0, 0), **resident_kw),
                ],
                out_specs=pl.BlockSpec((TB, C_pad), lambda b, s: (b, 0)),
                scratch_shapes=[pltpu.VMEM((TB, E), jnp.float32)],
            ),
            compiler_params=pltpu.CompilerParams(
                dimension_semantics=("parallel", "arbitrary"),
                vmem_limit_bytes=vmem_limit),
            cost_estimate=cost,
        )(x, w_pad, b_pad)

    try:
        out = _call(True)
    except Exception:
        # Fallback if single-buffered pipeline_mode is rejected on this jaxlib.
        out = _call(False)

    return out[:B, :C]


if __name__ == "__main__":
    # Small shapes implied by the forward: x is (batch, seq, embed_size).
    batch, seq, embed_size, num_classes = 2, 8, 32, 10

    key = jax.random.PRNGKey(0)
    kx, kw, kb = jax.random.split(key, 3)

    x = jax.random.normal(kx, (batch, seq, embed_size), dtype=jnp.float32)

    # Deterministic PyTorch-style Linear init: U(-1/sqrt(E), 1/sqrt(E)).
    bound = 1.0 / (embed_size ** 0.5)
    weight = jax.random.uniform(kw, (num_classes, embed_size),
                                minval=-bound, maxval=bound, dtype=jnp.float32)
    bias = jax.random.uniform(kb, (num_classes,),
                              minval=-bound, maxval=bound, dtype=jnp.float32)

    out = classifier_forward(x, weight, bias)
    out = jax.block_until_ready(out)

    # Reference check in plain JAX (same semantics as the PyTorch forward).
    ref = jnp.mean(x, axis=1) @ weight.T + bias
    assert out.shape == (batch, num_classes)
    assert jnp.allclose(out, ref, atol=1e-5, rtol=1e-5)

    print("KERNEL_OK")
</pallas_src>

<mosaic_0001>
module attributes {stable_mosaic.version = 11 : i64} {
  func.func @classifier_kernel(%arg0: i32, %arg1: i32, %arg2: memref<2x8x32xf32, #tpu.memory_space<vmem>>, %arg3: memref<128x32xf32, #tpu.memory_space<vmem>>, %arg4: memref<1x128xf32, #tpu.memory_space<vmem>>, %arg5: memref<2x128xf32, #tpu.memory_space<vmem>>, %arg6: memref<2x32xf32, #tpu.memory_space<vmem>>) attributes {dimension_semantics = [#tpu.dimension_semantics<parallel>, #tpu.dimension_semantics<arbitrary>], iteration_bounds = array<i64: 1, 1>, scalar_prefetch = 0 : i64, scratch_operands = 1 : i64, tpu.core_type = #tpu.core_type<tc>, window_params = [{transform_indices = @transform_0, window_bounds = array<i64: 2, 8, 32>}, {pipeline_mode = #tpu.pipeline_mode<synchronous>, transform_indices = @transform_1, window_bounds = array<i64: 128, 32>}, {pipeline_mode = #tpu.pipeline_mode<synchronous>, transform_indices = @transform_2, window_bounds = array<i64: 1, 128>}, {transform_indices = @transform_3, window_bounds = array<i64: 2, 128>}]} {
    %c0_i32 = arith.constant 0 : i32
    %0 = arith.cmpi eq, %arg1, %c0_i32 : i32
    %1 = arith.extui %0 : i1 to i32
    %c0_i32_0 = arith.constant 0 : i32
    %2 = arith.cmpi ne, %1, %c0_i32_0 : i32
    scf.if %2 {
      %cst_9 = arith.constant 0.000000e+00 : f32
      %11 = vector.broadcast %cst_9 : f32 to vector<2x32xf32>
      %c0_10 = arith.constant 0 : index
      %c0_11 = arith.constant 0 : index
      %12 = vector.load %arg6[%c0_10, %c0_11] : memref<2x32xf32, #tpu.memory_space<vmem>>, vector<2x32xf32>
      tpu.vector_store %arg6[%c0_10, %c0_11], %11 {strides = array<i32>} : memref<2x32xf32, #tpu.memory_space<vmem>>, vector<2x32xf32>,
    } else {
    }
    %c0 = arith.constant 0 : index
    %c0_1 = arith.constant 0 : index
    %3 = vector.load %arg6[%c0, %c0_1] : memref<2x32xf32, #tpu.memory_space<vmem>>, vector<2x32xf32>
    %c0_2 = arith.constant 0 : index
    %c0_3 = arith.constant 0 : index
    %c0_4 = arith.constant 0 : index
    %4 = vector.load %arg2[%c0_2, %c0_3, %c0_4] : memref<2x8x32xf32, #tpu.memory_space<vmem>>, vector<2x8x32xf32>
    %cst = arith.constant dense<0.000000e+00> : vector<2x32xf32>
    %5 = vector.multi_reduction <add>, %4, %cst [1] : vector<2x8x32xf32> to vector<2x32xf32>
    %6 = arith.addf %3, %5 : vector<2x32xf32>
    %c0_5 = arith.constant 0 : index
    %c0_6 = arith.constant 0 : index
    %7 = vector.load %arg6[%c0_5, %c0_6] : memref<2x32xf32, #tpu.memory_space<vmem>>, vector<2x32xf32>
    tpu.vector_store %arg6[%c0_5, %c0_6], %6 {strides = array<i32>} : memref<2x32xf32, #tpu.memory_space<vmem>>, vector<2x32xf32>,
    %c0_i32_7 = arith.constant 0 : i32
    %8 = arith.cmpi eq, %arg1, %c0_i32_7 : i32
    %9 = arith.extui %8 : i1 to i32
    %c0_i32_8 = arith.constant 0 : i32
    %10 = arith.cmpi ne, %9, %c0_i32_8 : i32
    scf.if %10 {
      %c0_9 = arith.constant 0 : index
      %c0_10 = arith.constant 0 : index
      %11 = vector.load %arg6[%c0_9, %c0_10] : memref<2x32xf32, #tpu.memory_space<vmem>>, vector<2x32xf32>
      %c0_11 = arith.constant 0 : index
      %c0_12 = arith.constant 0 : index
      %12 = vector.load %arg3[%c0_11, %c0_12] : memref<128x32xf32, #tpu.memory_space<vmem>>, vector<128x32xf32>
      %cst_13 = arith.constant dense<0.000000e+00> : vector<2x128xf32>
      %13 = tpu.matmul %11, %12, %cst_13 {dimension_numbers = #tpu.dot_dimension_numbers<[1], [1], [0], [0], [0, 0, 1, 0], [], []>} : vector<2x32xf32>, vector<128x32xf32>, vector<2x128xf32> -> vector<2x128xf32>
      %cst_14 = arith.constant 1.250000e-01 : f32
      %14 = vector.broadcast %cst_14 : f32 to vector<2x128xf32>
      %15 = arith.mulf %13, %14 : vector<2x128xf32>
      %c0_15 = arith.constant 0 : index
      %c0_16 = arith.constant 0 : index
      %16 = vector.load %arg4[%c0_15, %c0_16] : memref<1x128xf32, #tpu.memory_space<vmem>>, vector<1x128xf32>
      %17 = vector.broadcast %16 : vector<1x128xf32> to vector<2x128xf32>
      %18 = arith.addf %15, %17 : vector<2x128xf32>
      %c0_17 = arith.constant 0 : index
      %c0_18 = arith.constant 0 : index
      %19 = vector.load %arg5[%c0_17, %c0_18] : memref<2x128xf32, #tpu.memory_space<vmem>>, vector<2x128xf32>
      tpu.vector_store %arg5[%c0_17, %c0_18], %18 {strides = array<i32>} : memref<2x128xf32, #tpu.memory_space<vmem>>, vector<2x128xf32>,
    } else {
    }
    return
  }
  func.func @transform_0(%arg0: i32, %arg1: i32) -> (i32, i32, i32) {
    %c0_i32 = arith.constant 0 : i32
    %c0_i32_0 = arith.constant 0 : i32
    return %arg0, %arg1, %c0_i32 : i32, i32, i32
  }
  func.func @transform_1(%arg0: i32, %arg1: i32) -> (i32, i32) {
    %c0_i32 = arith.constant 0 : i32
    %c0_i32_0 = arith.constant 0 : i32
    %c0_i32_1 = arith.constant 0 : i32
    return %c0_i32, %c0_i32_0 : i32, i32
  }
  func.func @transform_2(%arg0: i32, %arg1: i32) -> (i32, i32) {
    %c0_i32 = arith.constant 0 : i32
    %c0_i32_0 = arith.constant 0 : i32
    %c0_i32_1 = arith.constant 0 : i32
    return %c0_i32, %c0_i32_0 : i32, i32
  }
  func.func @transform_3(%arg0: i32, %arg1: i32) -> (i32, i32) {
    %c0_i32 = arith.constant 0 : i32
    %c0_i32_0 = arith.constant 0 : i32
    return %arg0, %c0_i32 : i32, i32
  }
}

module attributes {stable_mosaic.version = 11 : i64} {
  func.func @classifier_kernel(%arg0: i32, %arg1: i32, %arg2: memref<2x8x32xf32, #tpu.memory_space<vmem>>, %arg3: memref<128x32xf32, #tpu.memory_space<vmem>>, %arg4: memref<1x128xf32, #tpu.memory_space<vmem>>, %arg5: memref<2x128xf32, #tpu.memory_space<vmem>>, %arg6: memref<2x32xf32, #tpu.memory_space<vmem>>) attributes {dimension_semantics = [#tpu.dimension_semantics<parallel>, #tpu.dimension_semantics<arbitrary>], iteration_bounds = array<i64: 1, 1>, scalar_prefetch = 0 : i64, scratch_operands = 1 : i64, tpu.core_type = #tpu.core_type<tc>, window_params = [{transform_indices = @transform_0, window_bounds = array<i64: 2, 8, 32>}, {pipeline_mode = #tpu.pipeline_mode<synchronous>, transform_indices = @transform_1, window_bounds = array<i64: 128, 32>}, {pipeline_mode = #tpu.pipeline_mode<synchronous>, transform_indices = @transform_2, window_bounds = array<i64: 1, 128>}, {transform_indices = @transform_3, window_bounds = array<i64: 2, 128>}]} {
    %c0_i32 = arith.constant 0 : i32
    %0 = arith.cmpi eq, %arg1, %c0_i32 : i32
    %1 = arith.extui %0 : i1 to i32
    %c0_i32_0 = arith.constant 0 : i32
    %2 = arith.cmpi ne, %1, %c0_i32_0 : i32
    scf.if %2 {
      %cst_9 = arith.constant 0.000000e+00 : f32
      %11 = vector.broadcast %cst_9 : f32 to vector<2x32xf32>
      %c0_10 = arith.constant 0 : index
      %c0_11 = arith.constant 0 : index
      %12 = vector.load %arg6[%c0_10, %c0_11] : memref<2x32xf32, #tpu.memory_space<vmem>>, vector<2x32xf32>
      tpu.vector_store %arg6[%c0_10, %c0_11], %11 {strides = array<i32>} : memref<2x32xf32, #tpu.memory_space<vmem>>, vector<2x32xf32>,
    } else {
    }
    %c0 = arith.constant 0 : index
    %c0_1 = arith.constant 0 : index
    %3 = vector.load %arg6[%c0, %c0_1] : memref<2x32xf32, #tpu.memory_space<vmem>>, vector<2x32xf32>
    %c0_2 = arith.constant 0 : index
    %c0_3 = arith.constant 0 : index
    %c0_4 = arith.constant 0 : index
    %4 = vector.load %arg2[%c0_2, %c0_3, %c0_4] : memref<2x8x32xf32, #tpu.memory_space<vmem>>, vector<2x8x32xf32>
    %cst = arith.constant dense<0.000000e+00> : vector<2x32xf32>
    %5 = vector.multi_reduction <add>, %4, %cst [1] : vector<2x8x32xf32> to vector<2x32xf32>
    %6 = arith.addf %3, %5 : vector<2x32xf32>
    %c0_5 = arith.constant 0 : index
    %c0_6 = arith.constant 0 : index
    %7 = vector.load %arg6[%c0_5, %c0_6] : memref<2x32xf32, #tpu.memory_space<vmem>>, vector<2x32xf32>
    tpu.vector_store %arg6[%c0_5, %c0_6], %6 {strides = array<i32>} : memref<2x32xf32, #tpu.memory_space<vmem>>, vector<2x32xf32>,
    %c0_i32_7 = arith.constant 0 : i32
    %8 = arith.cmpi eq, %arg1, %c0_i32_7 : i32
    %9 = arith.extui %8 : i1 to i32
    %c0_i32_8 = arith.constant 0 : i32
    %10 = arith.cmpi ne, %9, %c0_i32_8 : i32
    scf.if %10 {
      %c0_9 = arith.constant 0 : index
      %c0_10 = arith.constant 0 : index
      %11 = vector.load %arg6[%c0_9, %c0_10] : memref<2x32xf32, #tpu.memory_space<vmem>>, vector<2x32xf32>
      %c0_11 = arith.constant 0 : index
      %c0_12 = arith.constant 0 : index
      %12 = vector.load %arg3[%c0_11, %c0_12] : memref<128x32xf32, #tpu.memory_space<vmem>>, vector<128x32xf32>
      %cst_13 = arith.constant dense<0.000000e+00> : vector<2x128xf32>
      %13 = tpu.matmul %11, %12, %cst_13 {dimension_numbers = #tpu.dot_dimension_numbers<[1], [1], [0], [0], [0, 0, 1, 0], [], []>} : vector<2x32xf32>, vector<128x32xf32>, vector<2x128xf32> -> vector<2x128xf32>
      %cst_14 = arith.constant 1.250000e-01 : f32
      %14 = vector.broadcast %cst_14 : f32 to vector<2x128xf32>
      %15 = arith.mulf %13, %14 : vector<2x128xf32>
      %c0_15 = arith.constant 0 : index
      %c0_16 = arith.constant 0 : index
      %16 = vector.load %arg4[%c0_15, %c0_16] : memref<1x128xf32, #tpu.memory_space<vmem>>, vector<1x128xf32>
      %17 = vector.broadcast %16 : vector<1x128xf32> to vector<2x128xf32>
      %18 = arith.addf %15, %17 : vector<2x128xf32>
      %c0_17 = arith.constant 0 : index
      %c0_18 = arith.constant 0 : index
      %19 = vector.load %arg5[%c0_17, %c0_18] : memref<2x128xf32, #tpu.memory_space<vmem>>, vector<2x128xf32>
      tpu.vector_store %arg5[%c0_17, %c0_18], %18 {strides = array<i32>} : memref<2x128xf32, #tpu.memory_space<vmem>>, vector<2x128xf32>,
    } else {
    }
    return
  }
  func.func @transform_0(%arg0: i32, %arg1: i32) -> (i32, i32, i32) {
    %c0_i32 = arith.constant 0 : i32
    %c0_i32_0 = arith.constant 0 : i32
    return %arg0, %arg1, %c0_i32 : i32, i32, i32
  }
  func.func @transform_1(%arg0: i32, %arg1: i32) -> (i32, i32) {
    %c0_i32 = arith.constant 0 : i32
    %c0_i32_0 = arith.constant 0 : i32
    %c0_i32_1 = arith.constant 0 : i32
    return %c0_i32, %c0_i32_0 : i32, i32
  }
  func.func @transform_2(%arg0: i32, %arg1: i32) -> (i32, i32) {
    %c0_i32 = arith.constant 0 : i32
    %c0_i32_0 = arith.constant 0 : i32
    %c0_i32_1 = arith.constant 0 : i32
    return %c0_i32, %c0_i32_0 : i32, i32
  }
  func.func @transform_3(%arg0: i32, %arg1: i32) -> (i32, i32) {
    %c0_i32 = arith.constant 0 : i32
    %c0_i32_0 = arith.constant 0 : i32
    return %arg0, %c0_i32 : i32, i32
  }
}

</mosaic_0001>

<llo_original>
// kernel: tpu_custom_call.1
$region0: #{tpu_custom_call.1}
  #allocation0 [shape = 'u32[]', space=smem, size = 0x4, offset = 0x4, fixed_abs, tag = 'smem constant byte address 0x4 - core index']
  #allocation1 [shape = 'u32[144,128]{1,0:T(1,128)}', space=vmem, size = 0x12000, scoped, tag = 'internal scratch']
  #allocation2 [shape = 'f32[2,32]{1,0:T(2,128)}', space=vmem, size = 0x400, scoped, tag = 'scratch operand']
  %s0 = inlined_call_operand.vmem [shape: f32[2,8,32], index: 0, kind: input, shape index: {}]
  %s1 = inlined_call_operand.vmem [shape: f32[128,32], index: 1, kind: input, shape index: {}]
  %s2 = inlined_call_operand.vmem [shape: f32[1,128], index: 2, kind: input, shape index: {}]
  %s3 = inlined_call_operand.hbm [shape: f32[2,128], index: 3, kind: output, shape index: {}]
  %s4 = sld [smem:[#allocation0]]
  $region30: #{tpu_custom_call.1} parent=0
    _
  %s6 = ssub.s32 1, %s4
  %s7 = scalar_select 0, %s6, %s4
  $region1: #{tpu_custom_call.1} parent=0
    #allocation3 [shape = 'u8[1024]{0}', space=vmem, size = 0x400, scoped, tag = 'output window, operand 0, single buffered']
    #allocation4 [shape = 's32[1]{0}', space=sflag, size = 0x4, scoped, tag = 'scoped memory for tpu_custom_call.1']
    %8 = vsyncpa [#allocation4], 0
    // Predicated region
    $region2: #{tpu_custom_call.1} parent=1 // pred_check
      _
    $region3: #{tpu_custom_call.1} parent=1 // pred_check_branch
      %10 = sbr.rel (0) target = $region5
    $region4: #{tpu_custom_call.1} parent=1 // pred_region
      _
    $region5: #{tpu_custom_call.1} parent=1 // pred_fallthru
      _
    // Predicated region
    $region6: #{tpu_custom_call.1} parent=1 // pred_check
      _
    $region7: #{tpu_custom_call.1} parent=1 // pred_check_branch
      %12 = sbr.rel (0) target = $region9
    $region8: #{tpu_custom_call.1} parent=1 // pred_region
      _
    $region9: #{tpu_custom_call.1} parent=1 // pred_fallthru
      _
    // Predicated region
    $region10: #{tpu_custom_call.1} parent=1 // pred_check
      _
    $region11: #{tpu_custom_call.1} parent=1 // pred_check_branch
      %14 = sbr.rel (0) target = $region13
    $region12: #{tpu_custom_call.1} parent=1 // pred_region
      _
    $region13: #{tpu_custom_call.1} parent=1 // pred_fallthru
      _
    %p15 = scmp.eq.s32.totalorder 0, 0
    // Predicated region
    $region14: #{tpu_custom_call.1} parent=1 // pred_check
      %p16 = pneg %p15
    $region15: #{tpu_custom_call.1} parent=1 // pred_check_branch
      %18 = sbr.rel (%p16) target = $region17
    $region16: #{tpu_custom_call.1} parent=1 // pred_region
      %vm19 = vcmask 254976
      %20 = vst.msk [vmem:[#allocation2] sm:$0x3] %vm19, 0.0
    $region17: #{tpu_custom_call.1} parent=1 // pred_fallthru
      _
    %v21 = vld [vmem:[#allocation2] sm:$0x3]
    %v22 = vld [vmem:[%s0] sm:$0xff]
    %v23 = vld [vmem:[%s0 + $0x8] sm:$0xff]
    %vm24 = vcmask 261120
    %v25 = vsel %vm24, %v22, 0.0
    %v26 = vrot.slane %v25, 4
    %v27 = vadd.f32 %v25, %v26
    %v28 = vrot.slane %v27, 2
    %v29 = vadd.f32 %v27, %v28
    %v30 = vrot.slane %v29, 1
    %v31 = vadd.f32 %v29, %v30
    %v32 = vsel %vm24, %v23, 0.0
    %v33 = vrot.slane %v32, 4
    %v34 = vadd.f32 %v32, %v33
    %v35 = vrot.slane %v34, 2
    %v36 = vadd.f32 %v34, %v35
    %v37 = vrot.slane %v36, 1
    %v38 = vadd.f32 %v36, %v37
    %vm41 = vcmask 1041409
    %v42 = vsel %vm41, %v38, %v31
    %v44 = vadd.f32 %v21, %v42
    %vm45 = vcmask 254976
    %46 = vst.msk [vmem:[#allocation2] sm:$0x3] %vm45, %v44
    // Predicated region
    $region18: #{tpu_custom_call.1} parent=1 // pred_check
      %p47 = pneg %p15
    $region19: #{tpu_custom_call.1} parent=1 // pred_check_branch
      %49 = sbr.rel (%p47) target = $region21
    $region20: #{tpu_custom_call.1} parent=1 // pred_region
      %v50 = vld [vmem:[#allocation2] sm:$0x3]
      %v51 = vld [vmem:[%s1] sm:$0xff]
      %v52 = vld [vmem:[%s1 + $0x8] sm:$0xff]
      %v53 = vld [vmem:[%s1 + $0x10] sm:$0xff]
      %v54 = vld [vmem:[%s1 + $0x18] sm:$0xff]
      %v55 = vld [vmem:[%s1 + $0x20] sm:$0xff]
      %v56 = vld [vmem:[%s1 + $0x28] sm:$0xff]
      %v57 = vld [vmem:[%s1 + $0x30] sm:$0xff]
      %v58 = vld [vmem:[%s1 + $0x38] sm:$0xff]
      %v59 = vld [vmem:[%s1 + $0x40] sm:$0xff]
      %v60 = vld [vmem:[%s1 + $0x48] sm:$0xff]
      %v61 = vld [vmem:[%s1 + $0x50] sm:$0xff]
      %v62 = vld [vmem:[%s1 + $0x58] sm:$0xff]
      %v63 = vld [vmem:[%s1 + $0x60] sm:$0xff]
      %v64 = vld [vmem:[%s1 + $0x68] sm:$0xff]
      %v65 = vld [vmem:[%s1 + $0x70] sm:$0xff]
      %v66 = vld [vmem:[%s1 + $0x78] sm:$0xff]
      %v68 = vsel %vm24, %v50, 0
      %v71 = vsel %vm24, %v51, 0
      %v74 = vsel %vm24, %v52, 0
      %v77 = vsel %vm24, %v53, 0
      %v80 = vsel %vm24, %v54, 0
      %v83 = vsel %vm24, %v55, 0
      %v86 = vsel %vm24, %v56, 0
      %v89 = vsel %vm24, %v57, 0
      %v92 = vsel %vm24, %v58, 0
      %v95 = vsel %vm24, %v59, 0
      %v98 = vsel %vm24, %v60, 0
      %v101 = vsel %vm24, %v61, 0
      %v104 = vsel %vm24, %v62, 0
      %v107 = vsel %vm24, %v63, 0
      %v110 = vsel %vm24, %v64, 0
      %v113 = vsel %vm24, %v65, 0
      %v116 = vsel %vm24, %v66, 0
      %118 = vmatprep.subr.mxu0 0.0
      %119 = vmatpush1.xpose.msra.mxu0 %v71
      %120 = vmatprep.subr.mxu0 0.0
      %121 = vmatpush1.xpose.msra.mxu0 %v74
      %122 = vmatprep.subr.mxu0 0.0
      %123 = vmatpush1.xpose.msra.mxu0 %v77
      %124 = vmatprep.subr.mxu0 0.0
      %125 = vmatpush1.xpose.msra.mxu0 %v80
      %126 = vmatprep.subr.mxu0 0.0
      %127 = vmatpush1.xpose.msra.mxu0 %v83
      %128 = vmatprep.subr.mxu0 0.0
      %129 = vmatpush1.xpose.msra.mxu0 %v86
      %130 = vmatprep.subr.mxu0 0.0
      %131 = vmatpush1.xpose.msra.mxu0 %v89
      %132 = vmatprep.subr.mxu0 0.0
      %133 = vmatpush1.xpose.msra.mxu0 %v92
      %134 = vmatprep.subr.mxu0 0.0
      %135 = vmatpush1.xpose.msra.mxu0 %v95
      %136 = vmatprep.subr.mxu0 0.0
      %137 = vmatpush1.xpose.msra.mxu0 %v98
      %138 = vmatprep.subr.mxu0 0.0
      %139 = vmatpush1.xpose.msra.mxu0 %v101
      %140 = vmatprep.subr.mxu0 0.0
      %141 = vmatpush1.xpose.msra.mxu0 %v104
      %142 = vmatprep.subr.mxu0 0.0
      %143 = vmatpush1.xpose.msra.mxu0 %v107
      %144 = vmatprep.subr.mxu0 0.0
      %145 = vmatpush1.xpose.msra.mxu0 %v110
      %146 = vmatprep.subr.mxu0 0.0
      %147 = vmatpush1.xpose.msra.mxu0 %v113
      %148 = vmatprep.subr.mxu0 0.0
      %149 = vmatpush1.xpose.msra.mxu0 %v116
      %150 = vmatprep.subr.mxu0 0.0
      %151 = vmatpush1.xpose.msra.mxu0 0.0
      %152 = vmatprep.subr.mxu0 0.0
      %153 = vmatpush1.xpose.msra.mxu0 0.0
      %154 = vmatprep.subr.mxu0 0.0
      %155 = vmatpush1.xpose.msra.mxu0 0.0
      %156 = vmatprep.subr.mxu0 0.0
      %157 = vmatpush1.xpose.msra.mxu0 0.0
      %158 = vmatprep.subr.mxu0 0.0
      %159 = vmatpush1.xpose.msra.mxu0 0.0
      %160 = vmatprep.subr.mxu0 0.0
      %161 = vmatpush1.xpose.msra.mxu0 0.0
      %162 = vmatprep.subr.mxu0 0.0
      %163 = vmatpush1.xpose.msra.mxu0 0.0
      %164 = vmatprep.subr.mxu0 0.0
      %165 = vmatpush1.xpose.msra.mxu0 0.0
      %166 = vmatprep.subr.mxu0 0.0
      %167 = vmatpush1.xpose.msra.mxu0 0.0
      %168 = vmatprep.subr.mxu0 0.0
      %169 = vmatpush1.xpose.msra.mxu0 0.0
      %170 = vmatprep.subr.mxu0 0.0
      %171 = vmatpush1.xpose.msra.mxu0 0.0
      %172 = vmatprep.subr.mxu0 0.0
      %173 = vmatpush1.xpose.msra.mxu0 0.0
      %174 = vmatprep.subr.mxu0 0.0
      %175 = vmatpush1.xpose.msra.mxu0 0.0
      %176 = vmatprep.subr.mxu0 0.0
      %177 = vmatpush1.xpose.msra.mxu0 0.0
      %178 = vmatprep.subr.mxu0 0.0
      %179 = vmatpush1.xpose.msra.mxu0 0.0
      %180 = vmatprep.subr.mxu0 0.0
      %181 = vmatpush1.xpose.msra.mxu0 0.0
      %182 = vmatprep.mubr.f32.mxu0 0.0
      %183 = vmatmul.mubr.f32.gmra.mrb[0].mxu0 %v68
      %v184 = vpop.f32.mrb[0].mxu0
      %v185 = vadd.f32 0.0, %v184
      %v186 = vpop.f32.mrb[0].mxu0
      %187 = vdwg.mxu0
      %v188 = vmul.f32 %v185, 0.125
      %v189 = vld [vmem:[%s2] sm:$0x1]
      %v191 = vlaneseq
      %v192 = vshrl.u32 %v191, 7
      %v193 = vsub.s32 0, %v192
      %v194 = vrot.slane %v189, %v193
      %v196 = vadd.f32 %v188, %v194
      %197 = vst [vmem:[#allocation3] sm:$0x3] %v196
    $region21: #{tpu_custom_call.1} parent=1 // pred_fallthru
      _
    // Predicated region
    $region22: #{tpu_custom_call.1} parent=1 // pred_check
      _
    $region23: #{tpu_custom_call.1} parent=1 // pred_check_branch
      %199 = sbr.rel (0) target = $region25
    $region24: #{tpu_custom_call.1} parent=1 // pred_region
      %s201 = ssub.s32 32, 32
      %202 = vsyncadd [#allocation4], %s201
      %s204 = sshll.u32 [#allocation3], 4
      %s205 = int_to_ptr.vmem [resolvable:$true] %s204
      %207 = dma.vmem_to_hbm [thread:$0]  %s205, 32, %s3, [#allocation4]
    $region25: #{tpu_custom_call.1} parent=1 // pred_fallthru
      _
    // Predicated region
    $region26: #{tpu_custom_call.1} parent=1 // pred_check
      _
    $region27: #{tpu_custom_call.1} parent=1 // pred_check_branch
      %209 = sbr.rel (0) target = $region29
    $region28: #{tpu_custom_call.1} parent=1 // pred_region
      %210 = dma.done [#allocation4], 32
    $region29: #{tpu_custom_call.1} parent=1 // pred_fallthru
      _
    %211 = vsyncpa [#allocation4], 1

// kernel: tpu_custom_call.1
$region0: #{tpu_custom_call.1}
  #allocation0 [shape = 'u32[]', space=smem, size = 0x4, offset = 0x4, fixed_abs, tag = 'smem constant byte address 0x4 - core index']
  #allocation1 [shape = 'u32[144,128]{1,0:T(1,128)}', space=vmem, size = 0x12000, scoped, tag = 'internal scratch']
  #allocation2 [shape = 'f32[2,32]{1,0:T(2,128)}', space=vmem, size = 0x400, scoped, tag = 'scratch operand']
  %s0 = inlined_call_operand.vmem [shape: f32[2,8,32], index: 0, kind: input, shape index: {}]
  %s1 = inlined_call_operand.vmem [shape: f32[128,32], index: 1, kind: input, shape index: {}]
  %s2 = inlined_call_operand.vmem [shape: f32[1,128], index: 2, kind: input, shape index: {}]
  %s3 = inlined_call_operand.hbm [shape: f32[2,128], index: 3, kind: output, shape index: {}]
  %s4 = sld [smem:[#allocation0]]
  $region30: #{tpu_custom_call.1} parent=0
    _
  %s6 = ssub.s32 1, %s4
  %s7 = scalar_select 0, %s6, %s4
  $region1: #{tpu_custom_call.1} parent=0
    #allocation3 [shape = 'u8[1024]{0}', space=vmem, size = 0x400, scoped, tag = 'output window, operand 0, single buffered']
    #allocation4 [shape = 's32[1]{0}', space=sflag, size = 0x4, scoped, tag = 'scoped memory for tpu_custom_call.1']
    %8 = vsyncpa [#allocation4], 0
    // Predicated region
    $region2: #{tpu_custom_call.1} parent=1 // pred_check
      _
    $region3: #{tpu_custom_call.1} parent=1 // pred_check_branch
      %10 = sbr.rel (0) target = $region5
    $region4: #{tpu_custom_call.1} parent=1 // pred_region
      _
    $region5: #{tpu_custom_call.1} parent=1 // pred_fallthru
      _
    // Predicated region
    $region6: #{tpu_custom_call.1} parent=1 // pred_check
      _
    $region7: #{tpu_custom_call.1} parent=1 // pred_check_branch
      %12 = sbr.rel (0) target = $region9
    $region8: #{tpu_custom_call.1} parent=1 // pred_region
      _
    $region9: #{tpu_custom_call.1} parent=1 // pred_fallthru
      _
    // Predicated region
    $region10: #{tpu_custom_call.1} parent=1 // pred_check
      _
    $region11: #{tpu_custom_call.1} parent=1 // pred_check_branch
      %14 = sbr.rel (0) target = $region13
    $region12: #{tpu_custom_call.1} parent=1 // pred_region
      _
    $region13: #{tpu_custom_call.1} parent=1 // pred_fallthru
      _
    %p15 = scmp.eq.s32.totalorder 0, 0
    // Predicated region
    $region14: #{tpu_custom_call.1} parent=1 // pred_check
      %p16 = pneg %p15
    $region15: #{tpu_custom_call.1} parent=1 // pred_check_branch
      %18 = sbr.rel (%p16) target = $region17
    $region16: #{tpu_custom_call.1} parent=1 // pred_region
      %vm19 = vcmask 254976
      %20 = vst.msk [vmem:[#allocation2] sm:$0x3] %vm19, 0.0
    $region17: #{tpu_custom_call.1} parent=1 // pred_fallthru
      _
    %v21 = vld [vmem:[#allocation2] sm:$0x3]
    %v22 = vld [vmem:[%s0] sm:$0xff]
    %v23 = vld [vmem:[%s0 + $0x8] sm:$0xff]
    %vm24 = vcmask 261120
    %v25 = vsel %vm24, %v22, 0.0
    %v26 = vrot.slane %v25, 4
    %v27 = vadd.f32 %v25, %v26
    %v28 = vrot.slane %v27, 2
    %v29 = vadd.f32 %v27, %v28
    %v30 = vrot.slane %v29, 1
    %v31 = vadd.f32 %v29, %v30
    %v32 = vsel %vm24, %v23, 0.0
    %v33 = vrot.slane %v32, 4
    %v34 = vadd.f32 %v32, %v33
    %v35 = vrot.slane %v34, 2
    %v36 = vadd.f32 %v34, %v35
    %v37 = vrot.slane %v36, 1
    %v38 = vadd.f32 %v36, %v37
    %vm41 = vcmask 1041409
    %v42 = vsel %vm41, %v38, %v31
    %v44 = vadd.f32 %v21, %v42
    %vm45 = vcmask 254976
    %46 = vst.msk [vmem:[#allocation2] sm:$0x3] %vm45, %v44
    // Predicated region
    $region18: #{tpu_custom_call.1} parent=1 // pred_check
      %p47 = pneg %p15
    $region19: #{tpu_custom_call.1} parent=1 // pred_check_branch
      %49 = sbr.rel (%p47) target = $region21
    $region20: #{tpu_custom_call.1} parent=1 // pred_region
      %v50 = vld [vmem:[#allocation2] sm:$0x3]
      %v51 = vld [vmem:[%s1] sm:$0xff]
      %v52 = vld [vmem:[%s1 + $0x8] sm:$0xff]
      %v53 = vld [vmem:[%s1 + $0x10] sm:$0xff]
      %v54 = vld [vmem:[%s1 + $0x18] sm:$0xff]
      %v55 = vld [vmem:[%s1 + $0x20] sm:$0xff]
      %v56 = vld [vmem:[%s1 + $0x28] sm:$0xff]
      %v57 = vld [vmem:[%s1 + $0x30] sm:$0xff]
      %v58 = vld [vmem:[%s1 + $0x38] sm:$0xff]
      %v59 = vld [vmem:[%s1 + $0x40] sm:$0xff]
      %v60 = vld [vmem:[%s1 + $0x48] sm:$0xff]
      %v61 = vld [vmem:[%s1 + $0x50] sm:$0xff]
      %v62 = vld [vmem:[%s1 + $0x58] sm:$0xff]
      %v63 = vld [vmem:[%s1 + $0x60] sm:$0xff]
      %v64 = vld [vmem:[%s1 + $0x68] sm:$0xff]
      %v65 = vld [vmem:[%s1 + $0x70] sm:$0xff]
      %v66 = vld [vmem:[%s1 + $0x78] sm:$0xff]
      %v68 = vsel %vm24, %v50, 0
      %v71 = vsel %vm24, %v51, 0
      %v74 = vsel %vm24, %v52, 0
      %v77 = vsel %vm24, %v53, 0
      %v80 = vsel %vm24, %v54, 0
      %v83 = vsel %vm24, %v55, 0
      %v86 = vsel %vm24, %v56, 0
      %v89 = vsel %vm24, %v57, 0
      %v92 = vsel %vm24, %v58, 0
      %v95 = vsel %vm24, %v59, 0
      %v98 = vsel %vm24, %v60, 0
      %v101 = vsel %vm24, %v61, 0
      %v104 = vsel %vm24, %v62, 0
      %v107 = vsel %vm24, %v63, 0
      %v110 = vsel %vm24, %v64, 0
      %v113 = vsel %vm24, %v65, 0
      %v116 = vsel %vm24, %v66, 0
      %118 = vmatprep.subr.mxu0 0.0
      %119 = vmatpush1.xpose.msra.mxu0 %v71
      %120 = vmatprep.subr.mxu0 0.0
      %121 = vmatpush1.xpose.msra.mxu0 %v74
      %122 = vmatprep.subr.mxu0 0.0
      %123 = vmatpush1.xpose.msra.mxu0 %v77
      %124 = vmatprep.subr.mxu0 0.0
      %125 = vmatpush1.xpose.msra.mxu0 %v80
      %126 = vmatprep.subr.mxu0 0.0
      %127 = vmatpush1.xpose.msra.mxu0 %v83
      %128 = vmatprep.subr.mxu0 0.0
      %129 = vmatpush1.xpose.msra.mxu0 %v86
      %130 = vmatprep.subr.mxu0 0.0
      %131 = vmatpush1.xpose.msra.mxu0 %v89
      %132 = vmatprep.subr.mxu0 0.0
      %133 = vmatpush1.xpose.msra.mxu0 %v92
      %134 = vmatprep.subr.mxu0 0.0
      %135 = vmatpush1.xpose.msra.mxu0 %v95
      %136 = vmatprep.subr.mxu0 0.0
      %137 = vmatpush1.xpose.msra.mxu0 %v98
      %138 = vmatprep.subr.mxu0 0.0
      %139 = vmatpush1.xpose.msra.mxu0 %v101
      %140 = vmatprep.subr.mxu0 0.0
      %141 = vmatpush1.xpose.msra.mxu0 %v104
      %142 = vmatprep.subr.mxu0 0.0
      %143 = vmatpush1.xpose.msra.mxu0 %v107
      %144 = vmatprep.subr.mxu0 0.0
      %145 = vmatpush1.xpose.msra.mxu0 %v110
      %146 = vmatprep.subr.mxu0 0.0
      %147 = vmatpush1.xpose.msra.mxu0 %v113
      %148 = vmatprep.subr.mxu0 0.0
      %149 = vmatpush1.xpose.msra.mxu0 %v116
      %150 = vmatprep.subr.mxu0 0.0
      %151 = vmatpush1.xpose.msra.mxu0 0.0
      %152 = vmatprep.subr.mxu0 0.0
      %153 = vmatpush1.xpose.msra.mxu0 0.0
      %154 = vmatprep.subr.mxu0 0.0
      %155 = vmatpush1.xpose.msra.mxu0 0.0
      %156 = vmatprep.subr.mxu0 0.0
      %157 = vmatpush1.xpose.msra.mxu0 0.0
      %158 = vmatprep.subr.mxu0 0.0
      %159 = vmatpush1.xpose.msra.mxu0 0.0
      %160 = vmatprep.subr.mxu0 0.0
      %161 = vmatpush1.xpose.msra.mxu0 0.0
      %162 = vmatprep.subr.mxu0 0.0
      %163 = vmatpush1.xpose.msra.mxu0 0.0
      %164 = vmatprep.subr.mxu0 0.0
      %165 = vmatpush1.xpose.msra.mxu0 0.0
      %166 = vmatprep.subr.mxu0 0.0
      %167 = vmatpush1.xpose.msra.mxu0 0.0
      %168 = vmatprep.subr.mxu0 0.0
      %169 = vmatpush1.xpose.msra.mxu0 0.0
      %170 = vmatprep.subr.mxu0 0.0
      %171 = vmatpush1.xpose.msra.mxu0 0.0
      %172 = vmatprep.subr.mxu0 0.0
      %173 = vmatpush1.xpose.msra.mxu0 0.0
      %174 = vmatprep.subr.mxu0 0.0
      %175 = vmatpush1.xpose.msra.mxu0 0.0
      %176 = vmatprep.subr.mxu0 0.0
      %177 = vmatpush1.xpose.msra.mxu0 0.0
      %178 = vmatprep.subr.mxu0 0.0
      %179 = vmatpush1.xpose.msra.mxu0 0.0
      %180 = vmatprep.subr.mxu0 0.0
      %181 = vmatpush1.xpose.msra.mxu0 0.0
      %182 = vmatprep.mubr.f32.mxu0 0.0
      %183 = vmatmul.mubr.f32.gmra.mrb[0].mxu0 %v68
      %v184 = vpop.f32.mrb[0].mxu0
      %v185 = vadd.f32 0.0, %v184
      %v186 = vpop.f32.mrb[0].mxu0
      %187 = vdwg.mxu0
      %v188 = vmul.f32 %v185, 0.125
      %v189 = vld [vmem:[%s2] sm:$0x1]
      %v191 = vlaneseq
      %v192 = vshrl.u32 %v191, 7
      %v193 = vsub.s32 0, %v192
      %v194 = vrot.slane %v189, %v193
      %v196 = vadd.f32 %v188, %v194
      %197 = vst [vmem:[#allocation3] sm:$0x3] %v196
    $region21: #{tpu_custom_call.1} parent=1 // pred_fallthru
      _
    // Predicated region
    $region22: #{tpu_custom_call.1} parent=1 // pred_check
      _
    $region23: #{tpu_custom_call.1} parent=1 // pred_check_branch
      %199 = sbr.rel (0) target = $region25
    $region24: #{tpu_custom_call.1} parent=1 // pred_region
      %s201 = ssub.s32 32, 32
      %202 = vsyncadd [#allocation4], %s201
      %s204 = sshll.u32 [#allocation3], 4
      %s205 = int_to_ptr.vmem [resolvable:$true] %s204
      %207 = dma.vmem_to_hbm [thread:$0]  %s205, 32, %s3, [#allocation4]
    $region25: #{tpu_custom_call.1} parent=1 // pred_fallthru
      _
    // Predicated region
    $region26: #{tpu_custom_call.1} parent=1 // pred_check
      _
    $region27: #{tpu_custom_call.1} parent=1 // pred_check_branch
      %209 = sbr.rel (0) target = $region29
    $region28: #{tpu_custom_call.1} parent=1 // pred_region
      %210 = dma.done [#allocation4], 32
    $region29: #{tpu_custom_call.1} parent=1 // pred_fallthru
      _
    %211 = vsyncpa [#allocation4], 1

</llo_original>
